<compile_context>
chip_gen: v5e
topology: v5e:2x2
jax: 0.10.0
libtpu: 0.0.40
codegen_flags: <defaults>
</compile_context>

<pallas_src>
import jax
import jax.numpy as jnp
from jax.experimental import pallas as pl
from jax.experimental.pallas import tpu as pltpu


def _round_up(x, m):
    return ((x + m - 1) // m) * m


def _make_tcn_kernel(layer_meta, k, L, Lp, pad0, compute_dtype):
    """Whole-network fused kernel; one batch element per grid step.

    Ref order (as delivered by pallas_call):
      x_ref                        : (Cin0, L)
      per layer: w1p, w2p [, wdp]  : (Cout, 1 + k*Cin) packed [bias | taps]
      out_ref                      : (Cout_last, Lp)
      act_buf  (VMEM scratch)      : (Cmax, pad0 + Lp)   current activation,
                                     lanes [0, pad0) kept zero = causal pad
      stack_buf (VMEM scratch)     : (1 + k*Cmax, Lp)    shifted tap stack,
                                     row 0 = ones (bias), rows [1+m*Cin, ...)
                                     = activation shifted by m*dilation
      res_buf  (VMEM scratch)      : (Cmax, Lp) f32      residual branch
    """

    def kernel(*refs):
        x_ref = refs[0]
        out_ref = refs[-4]
        act_buf, stack_buf, res_buf = refs[-3], refs[-2], refs[-1]
        wrefs = refs[1:-4]

        f32 = jnp.float32
        c_max = act_buf.shape[0]

        # Zero ONLY the causal left-pad strip and the lane tail (not the whole
        # buffer).  Must run every grid step: under dimension_semantics=
        # ("parallel",) a second TensorCore never executes step 0, so this may
        # NOT be gated on pl.program_id(0) == 0.
        act_buf[0:c_max, 0:pad0] = jnp.zeros((c_max, pad0), compute_dtype)
        if Lp > L:
            act_buf[0:c_max, pad0 + L:pad0 + Lp] = jnp.zeros(
                (c_max, Lp - L), compute_dtype)

        # Constant ones row (row 0) of the tap stack: folds every conv bias
        # into the MXU contraction.  Rows >= 1 are rewritten per conv, so this
        # is written once per grid step.
        stack_buf[0:1, :] = jnp.ones((1, Lp), compute_dtype)

        # Stage the network input at lane offset pad0 (128-aligned).
        cin0 = layer_meta[0][0]
        act_buf[0:cin0, pad0:pad0 + L] = x_ref[...].astype(compute_dtype)

        def stage_stack(cin, dilation):
            # rows [1 + m*cin, 1 + (m+1)*cin) = activation shifted by
            # m*dilation (strictly causal: every shift >= 0, left-only).
            for m in range(k):
                shift = m * dilation
                stack_buf[1 + m * cin:1 + (m + 1) * cin, :] = (
                    act_buf[0:cin, pad0 - shift:pad0 - shift + Lp])

        wi = 0
        for (cin, cout, dilation, has_down) in layer_meta:
            w1p, w2p = wrefs[wi], wrefs[wi + 1]
            wi += 2
            if has_down:
                wdp = wrefs[wi]
                wi += 1

            # ---- conv1 (dilated, causal) -----------------------------------
            stage_stack(cin, dilation)

            # Residual branch, captured BEFORE act_buf is overwritten with h.
            # The unshifted activation is the m=0 tap at stack rows [1, 1+cin),
            # adjacent to the ones row -> the 1x1 downsample (weight+bias) is
            # one contiguous-slice matmul.
            if has_down:
                res_buf[0:cout, :] = jnp.dot(
                    wdp[...], stack_buf[0:1 + cin, :],
                    preferred_element_type=f32)
            else:
                res_buf[0:cout, :] = stack_buf[1:1 + cout, :].astype(f32)

            # conv1 -> chomp -> bias(ones row) -> ReLU (dropout == identity)
            h = jnp.dot(w1p[...], stack_buf[0:1 + k * cin, :],
                        preferred_element_type=f32)
            act_buf[0:cout, pad0:pad0 + Lp] = (
                jnp.maximum(h, 0.0).astype(compute_dtype))

            # ---- conv2 -> ReLU, + residual, -> ReLU ------------------------
            stage_stack(cout, dilation)
            o = jnp.dot(w2p[...], stack_buf[0:1 + k * cout, :],
                        preferred_element_type=f32)
            o = jnp.maximum(o, 0.0) + res_buf[0:cout, :]   # relu2 then +res
            act_buf[0:cout, pad0:pad0 + Lp] = (
                jnp.maximum(o, 0.0).astype(compute_dtype))

        cout_last = layer_meta[-1][1]
        out_ref[...] = act_buf[0:cout_last, pad0:pad0 + Lp].astype(out_ref.dtype)

    return kernel


def pack_params(params, compute_dtype=jnp.bfloat16):
    """One-time relayout of PyTorch-style (effective, weight_norm-folded) params.

    Each conv (Cout, Cin, k) + bias (Cout,) becomes a single (Cout, 1 + k*Cin)
    matrix:  column 0 = bias;  column 1 + m*Cin + c = w[:, c, k-1-m]  (the tap
    whose causal shift is m*dilation).  A single MXU matmul against the staged
    (1 + k*Cin, Lp) shifted stack then computes conv + bias in one pass.
    Default compute_dtype bfloat16 (f32 accumulation happens in-kernel);
    use jnp.float32 for bitwise-tight comparison against an f32 reference.
    """
    packed = []
    for p in params:
        q = {}
        for wname, bname, tag in (("w1", "b1", "w1p"), ("w2", "b2", "w2p")):
            w, b = p[wname], p[bname]
            cout, _, kk = w.shape
            cols = [b.reshape(cout, 1)]
            for m in range(kk):
                cols.append(w[:, :, kk - 1 - m])
            q[tag] = jnp.concatenate(cols, axis=1).astype(compute_dtype)
        if "wd" in p:
            wd, bd = p["wd"], p["bd"]
            cout = wd.shape[0]
            q["wdp"] = jnp.concatenate(
                [bd.reshape(cout, 1), wd[:, :, 0]], axis=1).astype(compute_dtype)
        packed.append(q)
    return packed


def tcn_forward(x, packed_params):
    """x: (B, Cin0, L) -> (B, Cout_last, L). packed_params from pack_params()."""
    B, cin0, L = x.shape
    n_layers = len(packed_params)
    compute_dtype = packed_params[0]["w1p"].dtype
    k = (packed_params[0]["w1p"].shape[1] - 1) // cin0

    Lp = _round_up(max(L, 128), 128)                 # lane-dense compute width
    max_pad = (k - 1) * (2 ** (n_layers - 1))        # largest causal shift
    pad0 = _round_up(max(max_pad, 1), 128)           # 128-aligned staging offset
    assert pad0 >= max_pad                           # causality invariant

    layer_meta = []
    args = [x]
    in_specs = [pl.BlockSpec((None, cin0, L), lambda b: (b, 0, 0))]
    c_max = cin0
    weight_bytes = 0

    def _wspec(shape):
        # Constant index_map -> VMEM resident across grid steps.
        return pl.BlockSpec(shape, lambda b: (0, 0))

    cin = cin0
    for i, p in enumerate(packed_params):
        cout = p["w1p"].shape[0]
        dilation = 2 ** i
        has_down = "wdp" in p
        layer_meta.append((cin, cout, dilation, has_down))
        c_max = max(c_max, cin, cout)
        for name in ("w1p", "w2p") + (("wdp",) if has_down else ()):
            arr = p[name]
            args.append(arr)
            in_specs.append(_wspec(arr.shape))
            weight_bytes += arr.size * arr.dtype.itemsize
        cin = cout

    cout_last = layer_meta[-1][1]
    cd_bytes = jnp.dtype(compute_dtype).itemsize

    # Explicit VMEM budget (matters on v7x's 64 MiB).
    scratch_bytes = (c_max * (pad0 + Lp) * cd_bytes          # act_buf
                     + (1 + k * c_max) * Lp * cd_bytes       # stack_buf
                     + c_max * Lp * 4)                       # res_buf (f32)
    io_bytes = 2 * (cin0 * L + cout_last * Lp) * x.dtype.itemsize
    live_bytes = 2 * c_max * Lp * 4                          # f32 matmul epilogue
    est = scratch_bytes + 2 * weight_bytes + io_bytes + live_bytes
    vmem_limit = int(min(110 * 2 ** 20, max(32 * 2 ** 20, 2 * est)))

    kernel = _make_tcn_kernel(tuple(layer_meta), k, L, Lp, pad0, compute_dtype)

    out = pl.pallas_call(
        kernel,
        out_shape=jax.ShapeDtypeStruct((B, cout_last, Lp), x.dtype),
        grid=(B,),
        in_specs=in_specs,
        out_specs=pl.BlockSpec((None, cout_last, Lp), lambda b: (b, 0, 0)),
        scratch_shapes=[
            pltpu.VMEM((c_max, pad0 + Lp), compute_dtype),   # act_buf
            pltpu.VMEM((1 + k * c_max, Lp), compute_dtype),  # stack_buf
            pltpu.VMEM((c_max, Lp), jnp.float32),            # res_buf
        ],
        compiler_params=pltpu.CompilerParams(
            dimension_semantics=("parallel",),               # batch -> megacore
            vmem_limit_bytes=vmem_limit),
    )(*args)
    return out[:, :, :L]


# ----------------------------- pure-JAX reference ----------------------------
def tcn_reference(x, params):
    """Reference TemporalConvNet forward (eval mode), PyTorch-layout params."""

    def causal_conv(h, w, b, d):
        cout, _, kk = w.shape
        L = h.shape[-1]
        pad = (kk - 1) * d
        hp = jnp.pad(h, ((0, 0), (0, 0), (pad, 0)))
        out = jnp.zeros((h.shape[0], cout, L), jnp.float32) + b[None, :, None]
        for j in range(kk):
            out = out + jnp.einsum("oc,bcl->bol", w[:, :, j],
                                   hp[:, :, j * d:j * d + L])
        return out

    h = x
    for i, p in enumerate(params):
        d = 2 ** i
        a = jax.nn.relu(causal_conv(h, p["w1"], p["b1"], d))
        res = h if "wd" not in p else causal_conv(h, p["wd"], p["bd"], 1)
        o = jax.nn.relu(causal_conv(a, p["w2"], p["b2"], d))   # relu2 (in net)
        h = jax.nn.relu(o + res)                               # final block ReLU
    return h


def init_params(key, num_inputs, num_channels, kernel_size):
    """Deterministic synthetic params (effective weights; weight_norm folded)."""
    all_params = []
    for i, out_ch in enumerate(num_channels):
        in_ch = num_inputs if i == 0 else num_channels[i - 1]
        key, k1, k2, k3, k4, k5, k6 = jax.random.split(key, 7)
        p = {
            "w1": 0.01 * jax.random.normal(k1, (out_ch, in_ch, kernel_size), jnp.float32),
            "b1": 0.01 * jax.random.normal(k2, (out_ch,), jnp.float32),
            "w2": 0.01 * jax.random.normal(k3, (out_ch, out_ch, kernel_size), jnp.float32),
            "b2": 0.01 * jax.random.normal(k4, (out_ch,), jnp.float32),
        }
        if in_ch != out_ch:
            p["wd"] = 0.01 * jax.random.normal(k5, (out_ch, in_ch, 1), jnp.float32)
            p["bd"] = 0.01 * jax.random.normal(k6, (out_ch,), jnp.float32)
        all_params.append(p)
    return all_params


if __name__ == "__main__":
    # x is (Batch, input_channel, seq_len), as in TemporalConvNet.forward.
    B, num_inputs, L = 2, 4, 16
    num_channels = [8, 8]            # two TemporalBlocks, dilations 1 and 2
    kernel_size = 2

    key = jax.random.PRNGKey(0)
    key, kx = jax.random.split(key)
    x = jax.random.normal(kx, (B, num_inputs, L), jnp.float32)

    torch_layout_params = init_params(key, num_inputs, num_channels, kernel_size)
    y_ref = tcn_reference(x, torch_layout_params)

    # f32 path: tight check against the f32 reference.
    packed_f32 = pack_params(torch_layout_params, compute_dtype=jnp.float32)
    y32 = jax.jit(tcn_forward)(x, packed_f32)
    jax.block_until_ready(y32)
    assert y32.shape == (B, num_channels[-1], L), y32.shape
    err32 = float(jnp.max(jnp.abs(y32 - y_ref)))
    assert jnp.allclose(y32, y_ref, rtol=1e-4, atol=1e-4), err32

    # Default bf16-MXU / f32-accumulate path: inter-layer activations are
    # rounded to bf16 (reference stays f32), so use a looser tolerance.
    packed_bf16 = pack_params(torch_layout_params)   # compute_dtype=bfloat16
    y16 = jax.jit(tcn_forward)(x, packed_bf16)
    jax.block_until_ready(y16)
    err16 = float(jnp.max(jnp.abs(y16 - y_ref)))
    assert jnp.allclose(y16, y_ref, rtol=3e-2, atol=3e-2), err16

    print("KERNEL_OK")
</pallas_src>

<mosaic_0001>
module attributes {stable_mosaic.version = 11 : i64} {
  func.func @kernel(%arg0: i32, %arg1: memref<1x4x16xf32, #tpu.memory_space<vmem>>, %arg2: memref<8x9xf32, #tpu.memory_space<vmem>>, %arg3: memref<8x17xf32, #tpu.memory_space<vmem>>, %arg4: memref<8x5xf32, #tpu.memory_space<vmem>>, %arg5: memref<8x17xf32, #tpu.memory_space<vmem>>, %arg6: memref<8x17xf32, #tpu.memory_space<vmem>>, %arg7: memref<1x8x128xf32, #tpu.memory_space<vmem>>, %arg8: memref<8x256xf32, #tpu.memory_space<vmem>>, %arg9: memref<17x128xf32, #tpu.memory_space<vmem>>, %arg10: memref<8x128xf32, #tpu.memory_space<vmem>>) attributes {dimension_semantics = [#tpu.dimension_semantics<parallel>], iteration_bounds = array<i64: 2>, scalar_prefetch = 0 : i64, scratch_operands = 3 : i64, tpu.core_type = #tpu.core_type<tc>, window_params = [{transform_indices = @transform_0, window_bounds = array<i64: 1, 4, 16>}, {pipeline_mode = #tpu.pipeline_mode<synchronous>, transform_indices = @transform_1, window_bounds = array<i64: 8, 9>}, {pipeline_mode = #tpu.pipeline_mode<synchronous>, transform_indices = @transform_2, window_bounds = array<i64: 8, 17>}, {pipeline_mode = #tpu.pipeline_mode<synchronous>, transform_indices = @transform_3, window_bounds = array<i64: 8, 5>}, {pipeline_mode = #tpu.pipeline_mode<synchronous>, transform_indices = @transform_4, window_bounds = array<i64: 8, 17>}, {pipeline_mode = #tpu.pipeline_mode<synchronous>, transform_indices = @transform_5, window_bounds = array<i64: 8, 17>}, {transform_indices = @transform_6, window_bounds = array<i64: 1, 8, 128>}]} {
    %cst = arith.constant 0.000000e+00 : f32
    %0 = vector.broadcast %cst : f32 to vector<8x128xf32>
    %c0 = arith.constant 0 : index
    %c0_0 = arith.constant 0 : index
    %1 = vector.load %arg8[%c0, %c0_0] : memref<8x256xf32, #tpu.memory_space<vmem>>, vector<8x128xf32>
    tpu.vector_store %arg8[%c0, %c0_0], %0 {strides = array<i32>} : memref<8x256xf32, #tpu.memory_space<vmem>>, vector<8x128xf32>,
    %cst_1 = arith.constant 0.000000e+00 : f32
    %2 = vector.broadcast %cst_1 : f32 to vector<8x112xf32>
    %c0_2 = arith.constant 0 : index
    %c144 = arith.constant 144 : index
    %3 = vector.load %arg8[%c0_2, %c144] : memref<8x256xf32, #tpu.memory_space<vmem>>, vector<8x112xf32>
    tpu.vector_store %arg8[%c0_2, %c144], %2 {strides = array<i32>} : memref<8x256xf32, #tpu.memory_space<vmem>>, vector<8x112xf32>,
    %cst_3 = arith.constant 1.000000e+00 : f32
    %4 = vector.broadcast %cst_3 : f32 to vector<1x128xf32>
    %c0_4 = arith.constant 0 : index
    %c0_5 = arith.constant 0 : index
    %5 = vector.load %arg9[%c0_4, %c0_5] : memref<17x128xf32, #tpu.memory_space<vmem>>, vector<1x128xf32>
    tpu.vector_store %arg9[%c0_4, %c0_5], %4 {strides = array<i32>} : memref<17x128xf32, #tpu.memory_space<vmem>>, vector<1x128xf32>,
    %c0_6 = arith.constant 0 : index
    %c0_7 = arith.constant 0 : index
    %c0_8 = arith.constant 0 : index
    %6 = vector.load %arg1[%c0_6, %c0_7, %c0_8] : memref<1x4x16xf32, #tpu.memory_space<vmem>>, vector<1x4x16xf32>
    %7 = vector.shape_cast %6 : vector<1x4x16xf32> to vector<4x16xf32>
    %c0_9 = arith.constant 0 : index
    %c128 = arith.constant 128 : index
    %8 = vector.load %arg8[%c0_9, %c128] : memref<8x256xf32, #tpu.memory_space<vmem>>, vector<4x16xf32>
    tpu.vector_store %arg8[%c0_9, %c128], %7 {strides = array<i32>} : memref<8x256xf32, #tpu.memory_space<vmem>>, vector<4x16xf32>,
    %c0_10 = arith.constant 0 : index
    %c128_11 = arith.constant 128 : index
    %9 = vector.load %arg8[%c0_10, %c128_11] : memref<8x256xf32, #tpu.memory_space<vmem>>, vector<4x128xf32>
    %c1 = arith.constant 1 : index
    %c0_12 = arith.constant 0 : index
    %10 = vector.load %arg9[%c1, %c0_12] : memref<17x128xf32, #tpu.memory_space<vmem>>, vector<4x128xf32>
    tpu.vector_store %arg9[%c1, %c0_12], %9 {strides = array<i32>} : memref<17x128xf32, #tpu.memory_space<vmem>>, vector<4x128xf32>,
    %c0_13 = arith.constant 0 : index
    %c127 = arith.constant 127 : index
    %11 = vector.load %arg8[%c0_13, %c127] : memref<8x256xf32, #tpu.memory_space<vmem>>, vector<4x128xf32>
    %c5 = arith.constant 5 : index
    %c0_14 = arith.constant 0 : index
    %12 = vector.load %arg9[%c5, %c0_14] : memref<17x128xf32, #tpu.memory_space<vmem>>, vector<4x128xf32>
    tpu.vector_store %arg9[%c5, %c0_14], %11 {strides = array<i32>} : memref<17x128xf32, #tpu.memory_space<vmem>>, vector<4x128xf32>,
    %c0_15 = arith.constant 0 : index
    %c0_16 = arith.constant 0 : index
    %13 = vector.load %arg4[%c0_15, %c0_16] : memref<8x5xf32, #tpu.memory_space<vmem>>, vector<8x5xf32>
    %c0_17 = arith.constant 0 : index
    %c0_18 = arith.constant 0 : index
    %14 = vector.load %arg9[%c0_17, %c0_18] : memref<17x128xf32, #tpu.memory_space<vmem>>, vector<5x128xf32>
    %cst_19 = arith.constant dense<0.000000e+00> : vector<8x128xf32>
    %15 = tpu.matmul %13, %14, %cst_19 {dimension_numbers = #tpu.dot_dimension_numbers<[1], [0], [0], [1], [0, 0, 1, 1], [], []>} : vector<8x5xf32>, vector<5x128xf32>, vector<8x128xf32> -> vector<8x128xf32>
    %c0_20 = arith.constant 0 : index
    %c0_21 = arith.constant 0 : index
    %16 = vector.load %arg10[%c0_20, %c0_21] : memref<8x128xf32, #tpu.memory_space<vmem>>, vector<8x128xf32>
    tpu.vector_store %arg10[%c0_20, %c0_21], %15 {strides = array<i32>} : memref<8x128xf32, #tpu.memory_space<vmem>>, vector<8x128xf32>,
    %c0_22 = arith.constant 0 : index
    %c0_23 = arith.constant 0 : index
    %17 = vector.load %arg2[%c0_22, %c0_23] : memref<8x9xf32, #tpu.memory_space<vmem>>, vector<8x9xf32>
    %c0_24 = arith.constant 0 : index
    %c0_25 = arith.constant 0 : index
    %18 = vector.load %arg9[%c0_24, %c0_25] : memref<17x128xf32, #tpu.memory_space<vmem>>, vector<9x128xf32>
    %cst_26 = arith.constant dense<0.000000e+00> : vector<8x128xf32>
    %19 = tpu.matmul %17, %18, %cst_26 {dimension_numbers = #tpu.dot_dimension_numbers<[1], [0], [0], [1], [0, 0, 1, 1], [], []>} : vector<8x9xf32>, vector<9x128xf32>, vector<8x128xf32> -> vector<8x128xf32>
    %cst_27 = arith.constant 0.000000e+00 : f32
    %20 = vector.broadcast %cst_27 : f32 to vector<8x128xf32>
    %21 = arith.maximumf %19, %20 : vector<8x128xf32>
    %c0_28 = arith.constant 0 : index
    %c128_29 = arith.constant 128 : index
    %22 = vector.load %arg8[%c0_28, %c128_29] : memref<8x256xf32, #tpu.memory_space<vmem>>, vector<8x128xf32>
    tpu.vector_store %arg8[%c0_28, %c128_29], %21 {strides = array<i32>} : memref<8x256xf32, #tpu.memory_space<vmem>>, vector<8x128xf32>,
    %c0_30 = arith.constant 0 : index
    %c128_31 = arith.constant 128 : index
    %23 = vector.load %arg8[%c0_30, %c128_31] : memref<8x256xf32, #tpu.memory_space<vmem>>, vector<8x128xf32>
    %c1_32 = arith.constant 1 : index
    %c0_33 = arith.constant 0 : index
    %24 = vector.load %arg9[%c1_32, %c0_33] : memref<17x128xf32, #tpu.memory_space<vmem>>, vector<8x128xf32>
    tpu.vector_store %arg9[%c1_32, %c0_33], %23 {strides = array<i32>} : memref<17x128xf32, #tpu.memory_space<vmem>>, vector<8x128xf32>,
    %c0_34 = arith.constant 0 : index
    %c127_35 = arith.constant 127 : index
    %25 = vector.load %arg8[%c0_34, %c127_35] : memref<8x256xf32, #tpu.memory_space<vmem>>, vector<8x128xf32>
    %c9 = arith.constant 9 : index
    %c0_36 = arith.constant 0 : index
    %26 = vector.load %arg9[%c9, %c0_36] : memref<17x128xf32, #tpu.memory_space<vmem>>, vector<8x128xf32>
    tpu.vector_store %arg9[%c9, %c0_36], %25 {strides = array<i32>} : memref<17x128xf32, #tpu.memory_space<vmem>>, vector<8x128xf32>,
    %c0_37 = arith.constant 0 : index
    %c0_38 = arith.constant 0 : index
    %27 = vector.load %arg3[%c0_37, %c0_38] : memref<8x17xf32, #tpu.memory_space<vmem>>, vector<8x17xf32>
    %c0_39 = arith.constant 0 : index
    %c0_40 = arith.constant 0 : index
    %28 = vector.load %arg9[%c0_39, %c0_40] : memref<17x128xf32, #tpu.memory_space<vmem>>, vector<17x128xf32>
    %cst_41 = arith.constant dense<0.000000e+00> : vector<8x128xf32>
    %29 = tpu.matmul %27, %28, %cst_41 {dimension_numbers = #tpu.dot_dimension_numbers<[1], [0], [0], [1], [0, 0, 1, 1], [], []>} : vector<8x17xf32>, vector<17x128xf32>, vector<8x128xf32> -> vector<8x128xf32>
    %cst_42 = arith.constant 0.000000e+00 : f32
    %30 = vector.broadcast %cst_42 : f32 to vector<8x128xf32>
    %31 = arith.maximumf %29, %30 : vector<8x128xf32>
    %c0_43 = arith.constant 0 : index
    %c0_44 = arith.constant 0 : index
    %32 = vector.load %arg10[%c0_43, %c0_44] : memref<8x128xf32, #tpu.memory_space<vmem>>, vector<8x128xf32>
    %33 = arith.addf %31, %32 : vector<8x128xf32>
    %cst_45 = arith.constant 0.000000e+00 : f32
    %34 = vector.broadcast %cst_45 : f32 to vector<8x128xf32>
    %35 = arith.maximumf %33, %34 : vector<8x128xf32>
    %c0_46 = arith.constant 0 : index
    %c128_47 = arith.constant 128 : index
    %36 = vector.load %arg8[%c0_46, %c128_47] : memref<8x256xf32, #tpu.memory_space<vmem>>, vector<8x128xf32>
    tpu.vector_store %arg8[%c0_46, %c128_47], %35 {strides = array<i32>} : memref<8x256xf32, #tpu.memory_space<vmem>>, vector<8x128xf32>,
    %c0_48 = arith.constant 0 : index
    %c128_49 = arith.constant 128 : index
    %37 = vector.load %arg8[%c0_48, %c128_49] : memref<8x256xf32, #tpu.memory_space<vmem>>, vector<8x128xf32>
    %c1_50 = arith.constant 1 : index
    %c0_51 = arith.constant 0 : index
    %38 = vector.load %arg9[%c1_50, %c0_51] : memref<17x128xf32, #tpu.memory_space<vmem>>, vector<8x128xf32>
    tpu.vector_store %arg9[%c1_50, %c0_51], %37 {strides = array<i32>} : memref<17x128xf32, #tpu.memory_space<vmem>>, vector<8x128xf32>,
    %c0_52 = arith.constant 0 : index
    %c126 = arith.constant 126 : index
    %39 = vector.load %arg8[%c0_52, %c126] : memref<8x256xf32, #tpu.memory_space<vmem>>, vector<8x128xf32>
    %c9_53 = arith.constant 9 : index
    %c0_54 = arith.constant 0 : index
    %40 = vector.load %arg9[%c9_53, %c0_54] : memref<17x128xf32, #tpu.memory_space<vmem>>, vector<8x128xf32>
    tpu.vector_store %arg9[%c9_53, %c0_54], %39 {strides = array<i32>} : memref<17x128xf32, #tpu.memory_space<vmem>>, vector<8x128xf32>,
    %c1_55 = arith.constant 1 : index
    %c0_56 = arith.constant 0 : index
    %41 = vector.load %arg9[%c1_55, %c0_56] : memref<17x128xf32, #tpu.memory_space<vmem>>, vector<8x128xf32>
    %c0_57 = arith.constant 0 : index
    %c0_58 = arith.constant 0 : index
    %42 = vector.load %arg10[%c0_57, %c0_58] : memref<8x128xf32, #tpu.memory_space<vmem>>, vector<8x128xf32>
    tpu.vector_store %arg10[%c0_57, %c0_58], %41 {strides = array<i32>} : memref<8x128xf32, #tpu.memory_space<vmem>>, vector<8x128xf32>,
    %c0_59 = arith.constant 0 : index
    %c0_60 = arith.constant 0 : index
    %43 = vector.load %arg5[%c0_59, %c0_60] : memref<8x17xf32, #tpu.memory_space<vmem>>, vector<8x17xf32>
    %c0_61 = arith.constant 0 : index
    %c0_62 = arith.constant 0 : index
    %44 = vector.load %arg9[%c0_61, %c0_62] : memref<17x128xf32, #tpu.memory_space<vmem>>, vector<17x128xf32>
    %cst_63 = arith.constant dense<0.000000e+00> : vector<8x128xf32>
    %45 = tpu.matmul %43, %44, %cst_63 {dimension_numbers = #tpu.dot_dimension_numbers<[1], [0], [0], [1], [0, 0, 1, 1], [], []>} : vector<8x17xf32>, vector<17x128xf32>, vector<8x128xf32> -> vector<8x128xf32>
    %cst_64 = arith.constant 0.000000e+00 : f32
    %46 = vector.broadcast %cst_64 : f32 to vector<8x128xf32>
    %47 = arith.maximumf %45, %46 : vector<8x128xf32>
    %c0_65 = arith.constant 0 : index
    %c128_66 = arith.constant 128 : index
    %48 = vector.load %arg8[%c0_65, %c128_66] : memref<8x256xf32, #tpu.memory_space<vmem>>, vector<8x128xf32>
    tpu.vector_store %arg8[%c0_65, %c128_66], %47 {strides = array<i32>} : memref<8x256xf32, #tpu.memory_space<vmem>>, vector<8x128xf32>,
    %c0_67 = arith.constant 0 : index
    %c128_68 = arith.constant 128 : index
    %49 = vector.load %arg8[%c0_67, %c128_68] : memref<8x256xf32, #tpu.memory_space<vmem>>, vector<8x128xf32>
    %c1_69 = arith.constant 1 : index
    %c0_70 = arith.constant 0 : index
    %50 = vector.load %arg9[%c1_69, %c0_70] : memref<17x128xf32, #tpu.memory_space<vmem>>, vector<8x128xf32>
    tpu.vector_store %arg9[%c1_69, %c0_70], %49 {strides = array<i32>} : memref<17x128xf32, #tpu.memory_space<vmem>>, vector<8x128xf32>,
    %c0_71 = arith.constant 0 : index
    %c126_72 = arith.constant 126 : index
    %51 = vector.load %arg8[%c0_71, %c126_72] : memref<8x256xf32, #tpu.memory_space<vmem>>, vector<8x128xf32>
    %c9_73 = arith.constant 9 : index
    %c0_74 = arith.constant 0 : index
    %52 = vector.load %arg9[%c9_73, %c0_74] : memref<17x128xf32, #tpu.memory_space<vmem>>, vector<8x128xf32>
    tpu.vector_store %arg9[%c9_73, %c0_74], %51 {strides = array<i32>} : memref<17x128xf32, #tpu.memory_space<vmem>>, vector<8x128xf32>,
    %c0_75 = arith.constant 0 : index
    %c0_76 = arith.constant 0 : index
    %53 = vector.load %arg6[%c0_75, %c0_76] : memref<8x17xf32, #tpu.memory_space<vmem>>, vector<8x17xf32>
    %c0_77 = arith.constant 0 : index
    %c0_78 = arith.constant 0 : index
    %54 = vector.load %arg9[%c0_77, %c0_78] : memref<17x128xf32, #tpu.memory_space<vmem>>, vector<17x128xf32>
    %cst_79 = arith.constant dense<0.000000e+00> : vector<8x128xf32>
    %55 = tpu.matmul %53, %54, %cst_79 {dimension_numbers = #tpu.dot_dimension_numbers<[1], [0], [0], [1], [0, 0, 1, 1], [], []>} : vector<8x17xf32>, vector<17x128xf32>, vector<8x128xf32> -> vector<8x128xf32>
    %cst_80 = arith.constant 0.000000e+00 : f32
    %56 = vector.broadcast %cst_80 : f32 to vector<8x128xf32>
    %57 = arith.maximumf %55, %56 : vector<8x128xf32>
    %c0_81 = arith.constant 0 : index
    %c0_82 = arith.constant 0 : index
    %58 = vector.load %arg10[%c0_81, %c0_82] : memref<8x128xf32, #tpu.memory_space<vmem>>, vector<8x128xf32>
    %59 = arith.addf %57, %58 : vector<8x128xf32>
    %cst_83 = arith.constant 0.000000e+00 : f32
    %60 = vector.broadcast %cst_83 : f32 to vector<8x128xf32>
    %61 = arith.maximumf %59, %60 : vector<8x128xf32>
    %c0_84 = arith.constant 0 : index
    %c128_85 = arith.constant 128 : index
    %62 = vector.load %arg8[%c0_84, %c128_85] : memref<8x256xf32, #tpu.memory_space<vmem>>, vector<8x128xf32>
    tpu.vector_store %arg8[%c0_84, %c128_85], %61 {strides = array<i32>} : memref<8x256xf32, #tpu.memory_space<vmem>>, vector<8x128xf32>,
    %c0_86 = arith.constant 0 : index
    %c128_87 = arith.constant 128 : index
    %63 = vector.load %arg8[%c0_86, %c128_87] : memref<8x256xf32, #tpu.memory_space<vmem>>, vector<8x128xf32>
    %c0_88 = arith.constant 0 : index
    %c0_89 = arith.constant 0 : index
    %c0_90 = arith.constant 0 : index
    %64 = vector.load %arg7[%c0_88, %c0_89, %c0_90] : memref<1x8x128xf32, #tpu.memory_space<vmem>>, vector<1x8x128xf32>
    %65 = vector.shape_cast %64 : vector<1x8x128xf32> to vector<8x128xf32>
    %66 = vector.shape_cast %63 : vector<8x128xf32> to vector<1x8x128xf32>
    tpu.vector_store %arg7[%c0_88, %c0_89, %c0_90], %66 {strides = array<i32>} : memref<1x8x128xf32, #tpu.memory_space<vmem>>, vector<1x8x128xf32>,
    return
  }
  func.func @transform_0(%arg0: i32) -> (i32, i32, i32) {
    %c0_i32 = arith.constant 0 : i32
    %c0_i32_0 = arith.constant 0 : i32
    %c0_i32_1 = arith.constant 0 : i32
    return %arg0, %c0_i32, %c0_i32_0 : i32, i32, i32
  }
  func.func @transform_1(%arg0: i32) -> (i32, i32) {
    %c0_i32 = arith.constant 0 : i32
    %c0_i32_0 = arith.constant 0 : i32
    %c0_i32_1 = arith.constant 0 : i32
    return %c0_i32, %c0_i32_0 : i32, i32
  }
  func.func @transform_2(%arg0: i32) -> (i32, i32) {
    %c0_i32 = arith.constant 0 : i32
    %c0_i32_0 = arith.constant 0 : i32
    %c0_i32_1 = arith.constant 0 : i32
    return %c0_i32, %c0_i32_0 : i32, i32
  }
  func.func @transform_3(%arg0: i32) -> (i32, i32) {
    %c0_i32 = arith.constant 0 : i32
    %c0_i32_0 = arith.constant 0 : i32
    %c0_i32_1 = arith.constant 0 : i32
    return %c0_i32, %c0_i32_0 : i32, i32
  }
  func.func @transform_4(%arg0: i32) -> (i32, i32) {
    %c0_i32 = arith.constant 0 : i32
    %c0_i32_0 = arith.constant 0 : i32
    %c0_i32_1 = arith.constant 0 : i32
    return %c0_i32, %c0_i32_0 : i32, i32
  }
  func.func @transform_5(%arg0: i32) -> (i32, i32) {
    %c0_i32 = arith.constant 0 : i32
    %c0_i32_0 = arith.constant 0 : i32
    %c0_i32_1 = arith.constant 0 : i32
    return %c0_i32, %c0_i32_0 : i32, i32
  }
  func.func @transform_6(%arg0: i32) -> (i32, i32, i32) {
    %c0_i32 = arith.constant 0 : i32
    %c0_i32_0 = arith.constant 0 : i32
    %c0_i32_1 = arith.constant 0 : i32
    return %arg0, %c0_i32, %c0_i32_0 : i32, i32, i32
  }
}

</mosaic_0001>

<llo_original>
// kernel: tcn_forward.1
$region0: #{tcn_forward.1}
  #allocation0 [shape = 'u32[]', space=smem, size = 0x4, offset = 0x4, fixed_abs, tag = 'smem constant byte address 0x4 - core index']
  #allocation1 [shape = 'u32[72,128]{1,0:T(1,128)}', space=vmem, size = 0x9000, scoped, tag = 'internal scratch']
  #allocation2 [shape = 'f32[8,256]{1,0:T(8,128)}', space=vmem, size = 0x2000, scoped, tag = 'scratch operand']
  #allocation3 [shape = 'f32[17,128]{1,0:T(8,128)}', space=vmem, size = 0x3000, scoped, tag = 'scratch operand']
  #allocation4 [shape = 'f32[8,128]{1,0:T(8,128)}', space=vmem, size = 0x1000, scoped, tag = 'scratch operand']
  %s0 = inlined_call_operand.hbm [shape: f32[2,4,16], index: 0, kind: input, shape index: {}]
  %s1 = inlined_call_operand.hbm [shape: f32[8,9], index: 1, kind: input, shape index: {}]
  %s2 = inlined_call_operand.hbm [shape: f32[8,17], index: 2, kind: input, shape index: {}]
  %s3 = inlined_call_operand.hbm [shape: f32[8,5], index: 3, kind: input, shape index: {}]
  %s4 = inlined_call_operand.hbm [shape: f32[8,17], index: 4, kind: input, shape index: {}]
  %s5 = inlined_call_operand.hbm [shape: f32[8,17], index: 5, kind: input, shape index: {}]
  %s6 = inlined_call_operand.hbm [shape: f32[2,8,128], index: 6, kind: output, shape index: {}]
  %s7 = sld [smem:[#allocation0]]
  $region81: #{tcn_forward.1} parent=0
    _
  %s9 = ssub.s32 1, %s7
  %s10 = scalar_select 0, %s9, %s7
  $region1: #{tcn_forward.1} parent=0
    #allocation5 [shape = 'u8[4096]{0}', space=vmem, size = 0x1000, scoped, tag = 'input window, operand 0']
    #allocation6 [shape = 's32[2]{0}', space=sflag, size = 0x8, scoped, tag = 'scoped memory for tcn_forward.1']
    #allocation7 [shape = 's32[2]{0}', space=sflag, size = 0x8, scoped, tag = 'scoped memory for tcn_forward.1']
    #allocation8 [shape = 'u8[4096]{0}', space=vmem, size = 0x1000, scoped, tag = 'input window, operand 1, single buffered']
    #allocation9 [shape = 's32[1]{0}', space=sflag, size = 0x4, scoped, tag = 'scoped memory for tcn_forward.1']
    #allocation10 [shape = 'u8[4096]{0}', space=vmem, size = 0x1000, scoped, tag = 'input window, operand 2, single buffered']
    #allocation11 [shape = 'u8[4096]{0}', space=vmem, size = 0x1000, scoped, tag = 'input window, operand 3, single buffered']
    #allocation12 [shape = 's32[1]{0}', space=sflag, size = 0x4, scoped, tag = 'scoped memory for tcn_forward.1']
    #allocation13 [shape = 'u8[4096]{0}', space=vmem, size = 0x1000, scoped, tag = 'input window, operand 4, single buffered']
    #allocation14 [shape = 'u8[4096]{0}', space=vmem, size = 0x1000, scoped, tag = 'input window, operand 5, single buffered']
    #allocation15 [shape = 's32[1]{0}', space=sflag, size = 0x4, scoped, tag = 'scoped memory for tcn_forward.1']
    #allocation16 [shape = 'u8[8192]{0}', space=vmem, size = 0x2000, scoped, tag = 'output window, operand 0']
    %11 = vsyncpa [#allocation6], 0
    %s12 = scalar_lea.sflag [#allocation6], 1
    %13 = vsyncpa %s12, 0
    %14 = vsyncpa [#allocation9], 0
    %15 = vsyncpa [#allocation12], 0
    %16 = vsyncpa [#allocation15], 0
    %17 = vsyncpa [#allocation7], 0
    %s18 = scalar_lea.sflag [#allocation7], 1
    %19 = vsyncpa %s18, 0
    loop: start=0, step=1, limit=4
    $region2: #{tcn_forward.1} parent=1 // loop_pre_header
      _
    $region3: #{tcn_forward.1} parent=1 // loop_header
      %s21 = sphi 0, %s25
      %p22 = scmp.ge.s32.totalorder %s21, 4
      %s31 = sphi 0, %s33
      %s34 = sphi 0, %s31
      %s35 = sphi 0, %s34
      %s51 = sphi 0, %s35
      %s55 = sphi 0, %s55
      %s57 = sphi 0, %s55
      %s58 = sphi 0, %s57
      %s72 = sphi 0, %s58
      %s76 = sphi 0, %s76
      %s78 = sphi 0, %s76
      %s79 = sphi 0, %s78
      %s93 = sphi 0, %s79
      %s97 = sphi 0, %s97
      %s99 = sphi 0, %s97
      %s100 = sphi 0, %s99
      %s114 = sphi 0, %s100
      %s118 = sphi 0, %s118
      %s120 = sphi 0, %s118
      %s121 = sphi 0, %s120
      %s135 = sphi 0, %s121
      %s139 = sphi 0, %s139
      %s141 = sphi 0, %s139
      %s142 = sphi 0, %s141
      %s156 = sphi 0, %s142
      %s162 = sphi 0, %s164
      %s165 = sphi 0, %s162
      %s166 = sphi 0, %s165
      %s182 = sphi 0, %s166
    $region4: #{tcn_forward.1} parent=1 // loop_header_branch
      %24 = sbr.rel (%p22) target = $region8
    $region5: #{tcn_forward.1} parent=1 // loop_body
      %s26 = ssub.s32 %s21, 1
      %s27 = ssub.s32 %s21, 2
      %s28 = sadd.s32 %s21, 1
      %s29 = ssub.s32 %s21, %s28
      %p30 = scmp.eq.s32.totalorder %s29, 0
      %s32 = sadd.s32 %s31, 1
      %s33 = scalar_select %p30, %s31, %s32
      %p36 = pneg %p30
      %p37 = scmp.eq.s32.totalorder %s21, 1
      %p38 = por %p36, %p37
      %p39 = scmp.ne.s32.totalorder %s31, %s34
      %p40 = scmp.eq.s32.totalorder %s21, 0
      %p41 = por %p39, %p40
      %p42 = scmp.ne.s32.totalorder %s31, %s34
      %p43 = scmp.eq.s32.totalorder %s26, 1
      %p44 = por %p42, %p43
      %p45 = scmp.ne.s32.totalorder %s34, %s35
      %p46 = scmp.eq.s32.totalorder %s26, 0
      %p47 = por %p45, %p46
      %p48 = scmp.ne.s32.totalorder %s34, %s35
      %p49 = scmp.eq.s32.totalorder %s27, 1
      %p50 = por %p48, %p49
      %p52 = scmp.ne.s32.totalorder %s35, %s51
      %p53 = scmp.eq.s32.totalorder %s27, 0
      %p54 = por %p52, %p53
      %s56 = sadd.s32 %s55, 1
      %p59 = scmp.eq.s32.totalorder %s21, 1
      %p60 = scmp.ne.s32.totalorder %s55, %s57
      %p61 = scmp.eq.s32.totalorder %s21, 0
      %p62 = por %p60, %p61
      %p63 = scmp.ne.s32.totalorder %s55, %s57
      %p64 = scmp.eq.s32.totalorder %s26, 1
      %p65 = por %p63, %p64
      %p66 = scmp.ne.s32.totalorder %s57, %s58
      %p67 = scmp.eq.s32.totalorder %s26, 0
      %p68 = por %p66, %p67
      %p69 = scmp.ne.s32.totalorder %s57, %s58
      %p70 = scmp.eq.s32.totalorder %s27, 1
      %p71 = por %p69, %p70
      %p73 = scmp.ne.s32.totalorder %s58, %s72
      %p74 = scmp.eq.s32.totalorder %s27, 0
      %p75 = por %p73, %p74
      %s77 = sadd.s32 %s76, 1
      %p80 = scmp.eq.s32.totalorder %s21, 1
      %p81 = scmp.ne.s32.totalorder %s76, %s78
      %p82 = scmp.eq.s32.totalorder %s21, 0
      %p83 = por %p81, %p82
      %p84 = scmp.ne.s32.totalorder %s76, %s78
      %p85 = scmp.eq.s32.totalorder %s26, 1
      %p86 = por %p84, %p85
      %p87 = scmp.ne.s32.totalorder %s78, %s79
      %p88 = scmp.eq.s32.totalorder %s26, 0
      %p89 = por %p87, %p88
      %p90 = scmp.ne.s32.totalorder %s78, %s79
      %p91 = scmp.eq.s32.totalorder %s27, 1
      %p92 = por %p90, %p91
      %p94 = scmp.ne.s32.totalorder %s79, %s93
      %p95 = scmp.eq.s32.totalorder %s27, 0
      %p96 = por %p94, %p95
      %s98 = sadd.s32 %s97, 1
      %p101 = scmp.eq.s32.totalorder %s21, 1
      %p102 = scmp.ne.s32.totalorder %s97, %s99
      %p103 = scmp.eq.s32.totalorder %s21, 0
      %p104 = por %p102, %p103
      %p105 = scmp.ne.s32.totalorder %s97, %s99
      %p106 = scmp.eq.s32.totalorder %s26, 1
      %p107 = por %p105, %p106
      %p108 = scmp.ne.s32.totalorder %s99, %s100
      %p109 = scmp.eq.s32.totalorder %s26, 0
      %p110 = por %p108, %p109
      %p111 = scmp.ne.s32.totalorder %s99, %s100
      %p112 = scmp.eq.s32.totalorder %s27, 1
      %p113 = por %p111, %p112
      %p115 = scmp.ne.s32.totalorder %s100, %s114
      %p116 = scmp.eq.s32.totalorder %s27, 0
      %p117 = por %p115, %p116
      %s119 = sadd.s32 %s118, 1
      %p122 = scmp.eq.s32.totalorder %s21, 1
      %p123 = scmp.ne.s32.totalorder %s118, %s120
      %p124 = scmp.eq.s32.totalorder %s21, 0
      %p125 = por %p123, %p124
      %p126 = scmp.ne.s32.totalorder %s118, %s120
      %p127 = scmp.eq.s32.totalorder %s26, 1
      %p128 = por %p126, %p127
      %p129 = scmp.ne.s32.totalorder %s120, %s121
      %p130 = scmp.eq.s32.totalorder %s26, 0
      %p131 = por %p129, %p130
      %p132 = scmp.ne.s32.totalorder %s120, %s121
      %p133 = scmp.eq.s32.totalorder %s27, 1
      %p134 = por %p132, %p133
      %p136 = scmp.ne.s32.totalorder %s121, %s135
      %p137 = scmp.eq.s32.totalorder %s27, 0
      %p138 = por %p136, %p137
      %s140 = sadd.s32 %s139, 1
      %p143 = scmp.eq.s32.totalorder %s21, 1
      %p144 = scmp.ne.s32.totalorder %s139, %s141
      %p145 = scmp.eq.s32.totalorder %s21, 0
      %p146 = por %p144, %p145
      %p147 = scmp.ne.s32.totalorder %s139, %s141
      %p148 = scmp.eq.s32.totalorder %s26, 1
      %p149 = por %p147, %p148
      %p150 = scmp.ne.s32.totalorder %s141, %s142
      %p151 = scmp.eq.s32.totalorder %s26, 0
      %p152 = por %p150, %p151
      %p153 = scmp.ne.s32.totalorder %s141, %s142
      %p154 = scmp.eq.s32.totalorder %s27, 1
      %p155 = por %p153, %p154
      %p157 = scmp.ne.s32.totalorder %s142, %s156
      %p158 = scmp.eq.s32.totalorder %s27, 0
      %p159 = por %p157, %p158
      %s160 = ssub.s32 %s21, %s28
      %p161 = scmp.eq.s32.totalorder %s160, 0
      %s163 = sadd.s32 %s162, 1
      %s164 = scalar_select %p161, %s162, %s163
      %p167 = pneg %p161
      %p168 = scmp.eq.s32.totalorder %s21, 1
      %p169 = por %p167, %p168
      %p170 = scmp.ne.s32.totalorder %s162, %s165
      %p171 = scmp.eq.s32.totalorder %s21, 0
      %p172 = por %p170, %p171
      %p173 = scmp.ne.s32.totalorder %s162, %s165
      %p174 = scmp.eq.s32.totalorder %s26, 1
      %p175 = por %p173, %p174
      %p176 = scmp.ne.s32.totalorder %s165, %s166
      %p177 = scmp.eq.s32.totalorder %s26, 0
      %p178 = por %p176, %p177
      %p179 = scmp.ne.s32.totalorder %s165, %s166
      %p180 = scmp.eq.s32.totalorder %s27, 1
      %p181 = por %p179, %p180
      %p183 = scmp.ne.s32.totalorder %s166, %s182
      %p184 = scmp.eq.s32.totalorder %s27, 0
      %p185 = por %p183, %p184
      %p186 = scmp.le.s32.totalorder 1, %s21
      %p187 = scmp.lt.s32.totalorder %s21, 3
      %p188 = pnand %p186, %p187
      %p189 = pneg %p188
      // Predicated region
      $region9: #{tcn_forward.1} parent=5 // pred_check
        _
      $region10: #{tcn_forward.1} parent=5 // pred_check_branch
        %191 = sbr.rel (%p188) target = $region12
      $region11: #{tcn_forward.1} parent=5 // pred_region
        %s192 = ssub.s32 %s21, 1
        // Predicated region
        $region13: #{tcn_forward.1} parent=11 // pred_check
          %p193 = pneg %p68
        $region14: #{tcn_forward.1} parent=11 // pred_check_branch
          %195 = sbr.rel (%p193) target = $region16
        $region15: #{tcn_forward.1} parent=11 // pred_region
          %197 = vsyncadd [#allocation9], 0
          %s199 = sshll.u32 %s1, 4
          %s200 = int_to_ptr.hbm [resolvable:$true] %s199
          %s201 = sshll.u32 [#allocation8], 4
          %s202 = int_to_ptr.vmem [resolvable:$true] %s201
          %204 = dma.hbm_to_vmem [thread:$0]  %s200, 128, %s202, [#allocation9]
        $region16: #{tcn_forward.1} parent=11 // pred_fallthru
          _
        // Predicated region
        $region17: #{tcn_forward.1} parent=11 // pred_check
          %p205 = pneg %p89
        $region18: #{tcn_forward.1} parent=11 // pred_check_branch
          %207 = sbr.rel (%p205) target = $region20
        $region19: #{tcn_forward.1} parent=11 // pred_region
          %209 = vsyncadd [#allocation9], 0
          %s211 = sshll.u32 %s2, 4
          %s212 = int_to_ptr.hbm [resolvable:$true] %s211
          %s213 = sshll.u32 [#allocation10], 4
          %s214 = int_to_ptr.vmem [resolvable:$true] %s213
          %216 = dma.hbm_to_vmem [thread:$0]  %s212, 128, %s214, [#allocation9]
        $region20: #{tcn_forward.1} parent=11 // pred_fallthru
          _
        // Predicated region
        $region21: #{tcn_forward.1} parent=11 // pred_check
          %p217 = pneg %p110
        $region22: #{tcn_forward.1} parent=11 // pred_check_branch
          %219 = sbr.rel (%p217) target = $region24
        $region23: #{tcn_forward.1} parent=11 // pred_region
          %221 = vsyncadd [#allocation12], 0
          %s223 = sshll.u32 %s3, 4
          %s224 = int_to_ptr.hbm [resolvable:$true] %s223
          %s225 = sshll.u32 [#allocation11], 4
          %s226 = int_to_ptr.vmem [resolvable:$true] %s225
          %228 = dma.hbm_to_vmem [thread:$0]  %s224, 128, %s226, [#allocation12]
        $region24: #{tcn_forward.1} parent=11 // pred_fallthru
          _
        // Predicated region
        $region25: #{tcn_forward.1} parent=11 // pred_check
          %p229 = pneg %p131
        $region26: #{tcn_forward.1} parent=11 // pred_check_branch
          %231 = sbr.rel (%p229) target = $region28
        $region27: #{tcn_forward.1} parent=11 // pred_region
          %233 = vsyncadd [#allocation12], 0
          %s235 = sshll.u32 %s4, 4
          %s236 = int_to_ptr.hbm [resolvable:$true] %s235
          %s237 = sshll.u32 [#allocation13], 4
          %s238 = int_to_ptr.vmem [resolvable:$true] %s237
          %240 = dma.hbm_to_vmem [thread:$0]  %s236, 128, %s238, [#allocation12]
        $region28: #{tcn_forward.1} parent=11 // pred_fallthru
          _
        // Predicated region
        $region29: #{tcn_forward.1} parent=11 // pred_check
          %p241 = pneg %p152
        $region30: #{tcn_forward.1} parent=11 // pred_check_branch
          %243 = sbr.rel (%p241) target = $region32
        $region31: #{tcn_forward.1} parent=11 // pred_region
          %245 = vsyncadd [#allocation15], 0
          %s247 = sshll.u32 %s5, 4
          %s248 = int_to_ptr.hbm [resolvable:$true] %s247
          %s249 = sshll.u32 [#allocation14], 4
          %s250 = int_to_ptr.vmem [resolvable:$true] %s249
          %252 = dma.hbm_to_vmem [thread:$0]  %s248, 128, %s250, [#allocation15]
        $region32: #{tcn_forward.1} parent=11 // pred_fallthru
          _
      $region12: #{tcn_forward.1} parent=5 // pred_fallthru
        _
      %p253 = scmp.lt.s32.totalorder %s21, 2
      // Predicated region
      $region33: #{tcn_forward.1} parent=5 // pred_check
        %p254 = pneg %p253
      $region34: #{tcn_forward.1} parent=5 // pred_check_branch
        %256 = sbr.rel (%p254) target = $region36
      $region35: #{tcn_forward.1} parent=5 // pred_region
        // Predicated region
        $region37: #{tcn_forward.1} parent=35 // pred_check
          %p257 = pneg %p41
        $region38: #{tcn_forward.1} parent=35 // pred_check_branch
          %259 = sbr.rel (%p257) target = $region40
        $region39: #{tcn_forward.1} parent=35 // pred_region
          %s260 = sand.u32 %s31, 1
          %s261 = scalar_lea.sflag [#allocation6], %s260
          %s262 = sand.u32 %s31, 1
          %s263 = smul.addr %s262, 4
          %s264 = scalar_lea.vmem [#allocation5], %s263
          %266 = vsyncadd %s261, 0
          %s267 = smul.addr %s21, 4
          %s268 = scalar_lea.hbm %s0, %s267
          %s270 = sshll.u32 %s268, 4
          %s271 = int_to_ptr.hbm [resolvable:$true] %s270
          %s272 = sshll.u32 %s264, 4
          %s273 = int_to_ptr.vmem [resolvable:$true] %s272
          %275 = dma.hbm_to_vmem [thread:$0]  %s271, 64, %s273, %s261
        $region40: #{tcn_forward.1} parent=35 // pred_fallthru
          _
      $region36: #{tcn_forward.1} parent=5 // pred_fallthru
        _
      %p276 = scmp.le.s32.totalorder 1, %s21
      %p277 = scmp.lt.s32.totalorder %s21, 3
      %p278 = pnand %p276, %p277
      %p279 = pneg %p278
      // Predicated region
      $region41: #{tcn_forward.1} parent=5 // pred_check
        _
      $region42: #{tcn_forward.1} parent=5 // pred_check_branch
        %281 = sbr.rel (%p278) target = $region44
      $region43: #{tcn_forward.1} parent=5 // pred_region
        %s282 = ssub.s32 %s21, 1
        %s283 = sand.u32 %s34, 1
        %s284 = scalar_lea.sflag [#allocation6], %s283
        %s285 = sand.u32 %s34, 1
        %s286 = smul.addr %s285, 4
        %s287 = scalar_lea.vmem [#allocation5], %s286
        // Predicated region
        $region45: #{tcn_forward.1} parent=43 // pred_check
          %p288 = pneg %p47
        $region46: #{tcn_forward.1} parent=43 // pred_check_branch
          %290 = sbr.rel (%p288) target = $region48
        $region47: #{tcn_forward.1} parent=43 // pred_region
          %292 = dma.done %s284, 64
        $region48: #{tcn_forward.1} parent=43 // pred_fallthru
          _
        // Predicated region
        $region49: #{tcn_forward.1} parent=43 // pred_check
          %p293 = pneg %p68
        $region50: #{tcn_forward.1} parent=43 // pred_check_branch
          %295 = sbr.rel (%p293) target = $region52
        $region51: #{tcn_forward.1} parent=43 // pred_region
          %297 = dma.done [#allocation9], 128
        $region52: #{tcn_forward.1} parent=43 // pred_fallthru
          _
        // Predicated region
        $region53: #{tcn_forward.1} parent=43 // pred_check
          %p298 = pneg %p89
        $region54: #{tcn_forward.1} parent=43 // pred_check_branch
          %300 = sbr.rel (%p298) target = $region56
        $region55: #{tcn_forward.1} parent=43 // pred_region
          %302 = dma.done [#allocation9], 128
        $region56: #{tcn_forward.1} parent=43 // pred_fallthru
          _
        // Predicated region
        $region57: #{tcn_forward.1} parent=43 // pred_check
          %p303 = pneg %p110
        $region58: #{tcn_forward.1} parent=43 // pred_check_branch
          %305 = sbr.rel (%p303) target = $region60
        $region59: #{tcn_forward.1} parent=43 // pred_region
          %307 = dma.done [#allocation12], 128
        $region60: #{tcn_forward.1} parent=43 // pred_fallthru
          _
        // Predicated region
        $region61: #{tcn_forward.1} parent=43 // pred_check
          %p308 = pneg %p131
        $region62: #{tcn_forward.1} parent=43 // pred_check_branch
          %310 = sbr.rel (%p308) target = $region64
        $region63: #{tcn_forward.1} parent=43 // pred_region
          %312 = dma.done [#allocation12], 128
        $region64: #{tcn_forward.1} parent=43 // pred_fallthru
          _
        // Predicated region
        $region65: #{tcn_forward.1} parent=43 // pred_check
          %p313 = pneg %p152
        $region66: #{tcn_forward.1} parent=43 // pred_check_branch
          %315 = sbr.rel (%p313) target = $region68
        $region67: #{tcn_forward.1} parent=43 // pred_region
          %317 = dma.done [#allocation15], 128
        $region68: #{tcn_forward.1} parent=43 // pred_fallthru
          _
        %s318 = sand.u32 %s34, 1
        %s319 = scalar_lea.sflag [#allocation6], %s318
        %s320 = sand.u32 %s34, 1
        %s321 = smul.addr %s320, 4
        %s322 = scalar_lea.vmem [#allocation5], %s321
        %p323 = pneg %p47
        %p324 = pneg %p44
        %p325 = pneg %p68
        %p326 = pneg %p65
        %p327 = pneg %p89
        %p328 = pneg %p86
        %p329 = pneg %p110
        %p330 = pneg %p107
        %p331 = pneg %p131
        %p332 = pneg %p128
        %p333 = pneg %p152
        %p334 = pneg %p149
        %p335 = pneg %p178
        %p336 = pneg %p175
        %s337 = sand.u32 %s165, 1
        %s338 = scalar_lea.sflag [#allocation7], %s337
        %s339 = sand.u32 %s165, 1
        %s340 = smul.addr %s339, 8
        %s341 = scalar_lea.vmem [#allocation16], %s340
        %342 = vst [vmem:[#allocation2] sm:$0xff] 0.0
        %vm343 = vcmask 1047680
        %344 = vst.msk [vmem:[#allocation2 + $0x8] sm:$0xff] %vm343, 0.0
        %345 = vst [vmem:[#allocation3] sm:$0x1] 1.0
        %v346 = vld [vmem:[%s287] sm:$0xf]
        %vm347 = vcmask 125952
        %348 = vst.msk [vmem:[#allocation2 + $0x8] sm:$0xf] %vm347, %v346
        %v349 = vld [vmem:[#allocation2 + $0x8] sm:$0xf]
        %350 = vst [vmem:[#allocation3 + $0x1] sm:$0xf] %v349
        %v351 = vld [vmem:[#allocation2] sm:$0xf]
        %v352 = vld [vmem:[#allocation2 + $0x8] sm:$0xf]
        %355 = vrot.lane.b32.xlu0 %v351, 1
        %v356 = vpop.permute.xlu0 %355
        %357 = vrot.lane.b32.xlu0 %v352, 1
        %v358 = vpop.permute.xlu0 %357
        %vm359 = vcmask 7168
        %v360 = vsel %vm359, %v356, %v358
        %362 = vst [vmem:[#allocation3 + $0x5] sm:$0xf] %v360
        %v363 = vld [vmem:[#allocation11] sm:$0xff]
        %v364 = vld [vmem:[#allocation3] sm:$0x1f]
        %vm365 = vcmask 39936
        %v367 = vsel %vm365, %v363, 0
        %vm369 = vcmask 1044480
        %v371 = vsel %vm369, %v364, 0
        %373 = vmatpush.msra.mxu0 0.0
        %374 = vmatpush.msra.mxu0 0.0
        %375 = vmatpush.msra.mxu0 0.0
        %376 = vmatpush.msra.mxu0 0.0
        %377 = vmatpush.msra.mxu0 0.0
        %378 = vmatpush.msra.mxu0 0.0
        %379 = vmatpush.msra.mxu0 0.0
        %380 = vmatpush.msra.mxu0 0.0
        %381 = vmatpush.msra.mxu0 0.0
        %382 = vmatpush.msra.mxu0 0.0
        %383 = vmatpush.msra.mxu0 0.0
        %384 = vmatpush.msra.mxu0 0.0
        %385 = vmatpush.msra.mxu0 0.0
        %386 = vmatpush.msra.mxu0 0.0
        %387 = vmatpush.msra.mxu0 0.0
        %388 = vmatpush.msra.mxu0 %v371
        %389 = vmatmul.f32.gmra.mxu0 %v367
        %v390 = vpop.f32.mrf.mxu0
        %v391 = vadd.f32 0.0, %v390
        %392 = vdwg.mxu0
        %393 = vst [vmem:[#allocation4] sm:$0xff] %v391
        %v394 = vld [vmem:[#allocation8] sm:$0xff]
        %v395 = vld [vmem:[#allocation3] sm:$0xff]
        %v396 = vld [vmem:[#allocation3 + $0x8] sm:$0x1]
        %vm397 = vcmask 72704
        %v399 = vsel %vm397, %v394, 0
        %vm401 = vcmask 1040384
        %v403 = vsel %vm401, %v396, 0
        %405 = vmatpush.msra.mxu0 0.0
        %406 = vmatpush.msra.mxu0 0.0
        %407 = vmatpush.msra.mxu0 0.0
        %408 = vmatpush.msra.mxu0 0.0
        %409 = vmatpush.msra.mxu0 0.0
        %410 = vmatpush.msra.mxu0 0.0
        %411 = vmatpush.msra.mxu0 0.0
        %412 = vmatpush.msra.mxu0 0.0
        %413 = vmatpush.msra.mxu0 0.0
        %414 = vmatpush.msra.mxu0 0.0
        %415 = vmatpush.msra.mxu0 0.0
        %416 = vmatpush.msra.mxu0 0.0
        %417 = vmatpush.msra.mxu0 0.0
        %418 = vmatpush.msra.mxu0 0.0
        %419 = vmatpush.msra.mxu0 %v403
        %420 = vmatpush.msra.mxu0 %v395
        %421 = vmatmul.f32.gmra.mxu0 %v399
        %v422 = vpop.f32.mrf.mxu0
        %v423 = vadd.f32 0.0, %v422
        %424 = vdwg.mxu0
        %v425 = vmax.f32 %v423, 0.0
        %426 = vst [vmem:[#allocation2 + $0x8] sm:$0xff] %v425
        %v427 = vld [vmem:[#allocation2 + $0x8] sm:$0xff]
        %428 = vst [vmem:[#allocation3 + $0x1] sm:$0xff] %v427
        %v429 = vld [vmem:[#allocation2] sm:$0xff]
        %v430 = vld [vmem:[#allocation2 + $0x8] sm:$0xff]
        %433 = vrot.lane.b32.xlu0 %v429, 1
        %v434 = vpop.permute.xlu0 %433
        %435 = vrot.lane.b32.xlu0 %v430, 1
        %v436 = vpop.permute.xlu0 %435
        %v437 = vsel %vm359, %v434, %v436
        %439 = vst [vmem:[#allocation3 + $0x9] sm:$0xff] %v437
        %v440 = vld [vmem:[#allocation10] sm:$0xff]
        %v441 = vld [vmem:[#allocation3] sm:$0xff]
        %v442 = vld [vmem:[#allocation3 + $0x8] sm:$0xff]
        %v443 = vld [vmem:[#allocation3 + $0x10] sm:$0x1]
        %vm444 = vcmask 138240
        %v446 = vsel %vm444, %v440, 0
        %v449 = vsel %vm401, %v443, 0
        %451 = vmatpush.msra.mxu0 0.0
        %452 = vmatpush.msra.mxu0 0.0
        %453 = vmatpush.msra.mxu0 0.0
        %454 = vmatpush.msra.mxu0 0.0
        %455 = vmatpush.msra.mxu0 0.0
        %456 = vmatpush.msra.mxu0 0.0
        %457 = vmatpush.msra.mxu0 0.0
        %458 = vmatpush.msra.mxu0 0.0
        %459 = vmatpush.msra.mxu0 0.0
        %460 = vmatpush.msra.mxu0 0.0
        %461 = vmatpush.msra.mxu0 0.0
        %462 = vmatpush.msra.mxu0 0.0
        %463 = vmatpush.msra.mxu0 0.0
        %464 = vmatpush.msra.mxu0 %v449
        %465 = vmatpush.msra.mxu0 %v442
        %466 = vmatpush.msra.mxu0 %v441
        %467 = vmatmul.f32.gmra.mxu0 %v446
        %v468 = vpop.f32.mrf.mxu0
        %v469 = vadd.f32 0.0, %v468
        %470 = vdwg.mxu0
        %v471 = vmax.f32 %v469, 0.0
        %v472 = vld [vmem:[#allocation4] sm:$0xff]
        %v473 = vadd.f32 %v471, %v472
        %v474 = vmax.f32 %v473, 0.0
        %475 = vst [vmem:[#allocation2 + $0x8] sm:$0xff] %v474
        %v476 = vld [vmem:[#allocation2 + $0x8] sm:$0xff]
        %477 = vst [vmem:[#allocation3 + $0x1] sm:$0xff] %v476
        %v478 = vld [vmem:[#allocation2] sm:$0xff]
        %v479 = vld [vmem:[#allocation2 + $0x8] sm:$0xff]
        %482 = vrot.lane.b32.xlu0 %v478, 2
        %v483 = vpop.permute.xlu0 %482
        %484 = vrot.lane.b32.xlu0 %v479, 2
        %v485 = vpop.permute.xlu0 %484
        %vm486 = vcmask 15360
        %v487 = vsel %vm486, %v483, %v485
        %489 = vst [vmem:[#allocation3 + $0x9] sm:$0xff] %v487
        %v490 = vld [vmem:[#allocation3 + $0x1] sm:$0xff]
        %491 = vst [vmem:[#allocation4] sm:$0xff] %v490
        %v492 = vld [vmem:[#allocation13] sm:$0xff]
        %v493 = vld [vmem:[#allocation3] sm:$0xff]
        %v494 = vld [vmem:[#allocation3 + $0x8] sm:$0xff]
        %v495 = vld [vmem:[#allocation3 + $0x10] sm:$0x1]
        %v497 = vsel %vm444, %v492, 0
        %v500 = vsel %vm401, %v495, 0
        %502 = vmatpush.msra.mxu0 0.0
        %503 = vmatpush.msra.mxu0 0.0
        %504 = vmatpush.msra.mxu0 0.0
        %505 = vmatpush.msra.mxu0 0.0
        %506 = vmatpush.msra.mxu0 0.0
        %507 = vmatpush.msra.mxu0 0.0
        %508 = vmatpush.msra.mxu0 0.0
        %509 = vmatpush.msra.mxu0 0.0
        %510 = vmatpush.msra.mxu0 0.0
        %511 = vmatpush.msra.mxu0 0.0
        %512 = vmatpush.msra.mxu0 0.0
        %513 = vmatpush.msra.mxu0 0.0
        %514 = vmatpush.msra.mxu0 0.0
        %515 = vmatpush.msra.mxu0 %v500
        %516 = vmatpush.msra.mxu0 %v494
        %517 = vmatpush.msra.mxu0 %v493
        %518 = vmatmul.f32.gmra.mxu0 %v497
        %v519 = vpop.f32.mrf.mxu0
        %v520 = vadd.f32 0.0, %v519
        %521 = vdwg.mxu0
        %v522 = vmax.f32 %v520, 0.0
        %523 = vst [vmem:[#allocation2 + $0x8] sm:$0xff] %v522
        %v524 = vld [vmem:[#allocation2 + $0x8] sm:$0xff]
        %525 = vst [vmem:[#allocation3 + $0x1] sm:$0xff] %v524
        %v526 = vld [vmem:[#allocation2] sm:$0xff]
        %v527 = vld [vmem:[#allocation2 + $0x8] sm:$0xff]
        %530 = vrot.lane.b32.xlu0 %v526, 2
        %v531 = vpop.permute.xlu0 %530
        %532 = vrot.lane.b32.xlu0 %v527, 2
        %v533 = vpop.permute.xlu0 %532
        %v534 = vsel %vm486, %v531, %v533
        %536 = vst [vmem:[#allocation3 + $0x9] sm:$0xff] %v534
        %v537 = vld [vmem:[#allocation14] sm:$0xff]
        %v538 = vld [vmem:[#allocation3] sm:$0xff]
        %v539 = vld [vmem:[#allocation3 + $0x8] sm:$0xff]
        %v540 = vld [vmem:[#allocation3 + $0x10] sm:$0x1]
        %v542 = vsel %vm444, %v537, 0
        %v545 = vsel %vm401, %v540, 0
        %547 = vmatpush.msra.mxu0 0.0
        %548 = vmatpush.msra.mxu0 0.0
        %549 = vmatpush.msra.mxu0 0.0
        %550 = vmatpush.msra.mxu0 0.0
        %551 = vmatpush.msra.mxu0 0.0
        %552 = vmatpush.msra.mxu0 0.0
        %553 = vmatpush.msra.mxu0 0.0
        %554 = vmatpush.msra.mxu0 0.0
        %555 = vmatpush.msra.mxu0 0.0
        %556 = vmatpush.msra.mxu0 0.0
        %557 = vmatpush.msra.mxu0 0.0
        %558 = vmatpush.msra.mxu0 0.0
        %559 = vmatpush.msra.mxu0 0.0
        %560 = vmatpush.msra.mxu0 %v545
        %561 = vmatpush.msra.mxu0 %v539
        %562 = vmatpush.msra.mxu0 %v538
        %563 = vmatmul.f32.gmra.mxu0 %v542
        %v564 = vpop.f32.mrf.mxu0
        %v565 = vadd.f32 0.0, %v564
        %566 = vdwg.mxu0
        %v567 = vmax.f32 %v565, 0.0
        %v568 = vld [vmem:[#allocation4] sm:$0xff]
        %v569 = vadd.f32 %v567, %v568
        %v570 = vmax.f32 %v569, 0.0
        %571 = vst [vmem:[#allocation2 + $0x8] sm:$0xff] %v570
        %v572 = vld [vmem:[#allocation2 + $0x8] sm:$0xff]
        %573 = vst [vmem:[%s341] sm:$0xff] %v572
        %s574 = sand.u32 %s165, 1
        %s575 = scalar_lea.sflag [#allocation7], %s574
        %s576 = sand.u32 %s165, 1
        %s577 = smul.addr %s576, 8
        %s578 = scalar_lea.vmem [#allocation16], %s577
        // Predicated region
        $region69: #{tcn_forward.1} parent=43 // pred_check
          %p579 = pneg %p175
        $region70: #{tcn_forward.1} parent=43 // pred_check_branch
          %581 = sbr.rel (%p579) target = $region72
        $region71: #{tcn_forward.1} parent=43 // pred_region
          %583 = vsyncadd %s575, 0
          %s584 = smul.addr %s26, 8
          %s585 = scalar_lea.hbm %s6, %s584
          %s587 = sshll.u32 %s578, 4
          %s588 = int_to_ptr.vmem [resolvable:$true] %s587
          %s589 = sshll.u32 %s585, 4
          %s590 = int_to_ptr.hbm [resolvable:$true] %s589
          %592 = dma.vmem_to_hbm [thread:$0]  %s588, 128, %s590, %s575
        $region72: #{tcn_forward.1} parent=43 // pred_fallthru
          _
      $region44: #{tcn_forward.1} parent=5 // pred_fallthru
        _
      %p593 = scmp.le.s32.totalorder 2, %s21
      // Predicated region
      $region73: #{tcn_forward.1} parent=5 // pred_check
        %p594 = pneg %p593
      $region74: #{tcn_forward.1} parent=5 // pred_check_branch
        %596 = sbr.rel (%p594) target = $region76
      $region75: #{tcn_forward.1} parent=5 // pred_region
        %s597 = ssub.s32 %s21, 2
        // Predicated region
        $region77: #{tcn_forward.1} parent=75 // pred_check
          %p598 = pneg %p181
        $region78: #{tcn_forward.1} parent=75 // pred_check_branch
          %600 = sbr.rel (%p598) target = $region80
        $region79: #{tcn_forward.1} parent=75 // pred_region
          %s601 = sand.u32 %s166, 1
          %s602 = scalar_lea.sflag [#allocation7], %s601
          %s603 = sand.u32 %s166, 1
          %s604 = smul.addr %s603, 8
          %s605 = scalar_lea.vmem [#allocation16], %s604
          %607 = dma.done %s602, 128
        $region80: #{tcn_forward.1} parent=75 // pred_fallthru
          _
      $region76: #{tcn_forward.1} parent=5 // pred_fallthru
        _
    $region6: #{tcn_forward.1} parent=1 // loop_footer
      %s25 = sadd.s32 1, %s21
    $region7: #{tcn_forward.1} parent=1 // loop_footer_branch
      %20 = sbr.rel target = $region3
    $region8: #{tcn_forward.1} parent=1 // loop_exit
      _
    %608 = vsyncpa [#allocation6], 1
    %s609 = scalar_lea.sflag [#allocation6], 1
    %610 = vsyncpa %s609, 1
    %611 = vsyncpa [#allocation9], 1
    %612 = vsyncpa [#allocation12], 1
    %613 = vsyncpa [#allocation15], 1
    %614 = vsyncpa [#allocation7], 1
    %s615 = scalar_lea.sflag [#allocation7], 1
    %616 = vsyncpa %s615, 1

</llo_original>
